<compile_context>
chip_gen: v7x
topology: tpu7x:2x2x1
jax: 0.10.0
libtpu: 0.0.40
codegen_flags: <defaults>
</compile_context>

<pallas_src>
import functools

import jax
import jax.numpy as jnp
from jax.experimental import pallas as pl
from jax.experimental.pallas import tpu as pltpu


def _round_up(x: int, m: int) -> int:
    return ((x + m - 1) // m) * m


def _make_decoder_kernel(n_layers: int, hidden_dim: int):
    """Builds the Pallas kernel closed over static layer count / hidden size."""

    def kernel(x_ref, h_ref, c_ref, *rest):
        # rest = [w_cat_0, b_0, ..., w_cat_{L-1}, b_{L-1}, fc_w_T, fc_b,
        #         pred_ref, h_out_ref, c_out_ref]
        n_w = 2 * n_layers
        w_refs = rest[:n_w]
        fc_w_ref = rest[n_w]
        fc_b_ref = rest[n_w + 1]
        pred_ref, h_out_ref, c_out_ref = rest[n_w + 2:]

        H = hidden_dim
        x = x_ref[...]  # (B, E) for layer 0, then (B, H)

        for l in range(n_layers):
            w_cat = w_refs[2 * l][...]      # (in_dim + H, 4H) = [w_ih^T; w_hh^T]
            b = w_refs[2 * l + 1][...]      # (1, 4H) = b_ih + b_hh

            h_prev = h_ref[l]               # (B, H)
            c_prev = c_ref[l]               # (B, H)

            # One fused MXU matmul per layer.
            xh = jnp.concatenate([x, h_prev], axis=1)          # (B, in_dim + H)
            gates = jnp.dot(xh, w_cat, preferred_element_type=jnp.float32) + b

            # Single sigmoid on the full lane-dense 4H vreg; tanh only on g.
            sig = jax.nn.sigmoid(gates)
            i_g = sig[:, 0 * H:1 * H]
            f_g = sig[:, 1 * H:2 * H]
            o_g = sig[:, 3 * H:4 * H]
            g_g = jnp.tanh(gates[:, 2 * H:3 * H])

            c_new = f_g * c_prev + i_g * g_g
            h_new = o_g * jnp.tanh(c_new)

            # h/c outputs alias the inputs; each slice is read before written.
            h_out_ref[l] = h_new
            c_out_ref[l] = c_new
            x = h_new                       # feed next layer

        # Lane-dense output projection (O padded to a multiple of 128 lanes).
        pred_ref[...] = (
            jnp.dot(x, fc_w_ref[...], preferred_element_type=jnp.float32)
            + fc_b_ref[...]
        )

    return kernel


def init_decoder_params(key, output_dim, emb_dim, hidden_dim, n_layers, pad_idx=0):
    """Deterministic synthetic parameters matching the PyTorch module's shapes."""
    keys = jax.random.split(key, 3 + 4 * n_layers)
    k = 1.0 / jnp.sqrt(hidden_dim)

    emb = jax.random.uniform(keys[0], (output_dim, emb_dim), jnp.float32, -0.1, 0.1)
    emb = emb.at[pad_idx].set(0.0)  # padding_idx row is zeros (as in nn.Embedding)

    layers = []
    for l in range(n_layers):
        in_dim = emb_dim if l == 0 else hidden_dim
        kw = keys[3 + 4 * l: 3 + 4 * (l + 1)]
        w_ih = jax.random.uniform(kw[0], (4 * hidden_dim, in_dim), jnp.float32, -k, k)
        w_hh = jax.random.uniform(kw[1], (4 * hidden_dim, hidden_dim), jnp.float32, -k, k)
        b_ih = jax.random.uniform(kw[2], (4 * hidden_dim,), jnp.float32, -k, k)
        b_hh = jax.random.uniform(kw[3], (4 * hidden_dim,), jnp.float32, -k, k)
        layers.append(dict(w_ih=w_ih, w_hh=w_hh, b_ih=b_ih, b_hh=b_hh))

    fc_w = jax.random.uniform(keys[1], (output_dim, hidden_dim), jnp.float32, -k, k)
    fc_b = jax.random.uniform(keys[2], (output_dim,), jnp.float32, -k, k)

    return dict(embedding=emb, layers=layers, fc_w=fc_w, fc_b=fc_b)


def prepare_decoder_params(params):
    """One-time layout conversion.  Call ONCE, outside the per-step decode loop.

    - Stacks [w_ih^T; w_hh^T] -> (in_dim + H, 4H) so each layer is one matmul.
    - Fuses b_ih + b_hh.
    - Transposes fc_w and zero-pads its output dim to a multiple of 128 so the
      prediction store in the kernel is lane-dense.
    """
    H = params["layers"][0]["w_hh"].shape[1]
    w_cat, b_fused = [], []
    for lp in params["layers"]:
        w_cat.append(jnp.concatenate([jnp.transpose(lp["w_ih"]),
                                      jnp.transpose(lp["w_hh"])], axis=0))
        b_fused.append((lp["b_ih"] + lp["b_hh"]).reshape(1, 4 * H))

    O = params["fc_w"].shape[0]
    O_pad = _round_up(O, 128)
    fc_w_t = jnp.pad(jnp.transpose(params["fc_w"]), ((0, 0), (0, O_pad - O)))
    fc_b = jnp.pad(params["fc_b"], (0, O_pad - O)).reshape(1, O_pad)

    return dict(embedding=params["embedding"], w_cat=w_cat, b=b_fused,
                fc_w_t=fc_w_t, fc_b=fc_b)


@functools.partial(jax.jit, static_argnames=("out_dim",))
def decoder_forward(tokens, hidden, cell, prep, *, out_dim):
    """Mirrors Decoder.forward(input_step, hidden, cell) for one decode step."""
    B = tokens.shape[0]
    L, _, H = hidden.shape
    E = prep["embedding"].shape[1]
    O_pad = prep["fc_w_t"].shape[1]

    # Glue: embedding lookup (unsqueeze(1) -> Embedding -> squeeze(1)).
    x = jnp.take(prep["embedding"], tokens, axis=0)  # (B, E)

    weight_args = []
    for l in range(L):
        weight_args.append(prep["w_cat"][l])   # (in_dim + H, 4H)
        weight_args.append(prep["b"][l])       # (1, 4H)

    kernel = _make_decoder_kernel(L, H)
    n_inputs = 3 + 2 * L + 2
    vmem_spec = pl.BlockSpec(memory_space=pltpu.MemorySpace.VMEM)

    # Advisory cost hint: this custom call is tiny.
    flops = 0
    weight_bytes = 0
    for l in range(L):
        in_dim = E if l == 0 else H
        flops += 2 * B * (in_dim + H) * 4 * H
        weight_bytes += ((in_dim + H) * 4 * H + 4 * H) * 4
    flops += 2 * B * H * O_pad
    weight_bytes += (H * O_pad + O_pad) * 4
    bytes_accessed = weight_bytes + B * E * 4 + 4 * L * B * H * 4 + B * O_pad * 4
    transcendentals = L * B * 6 * H

    pred_pad, h_out, c_out = pl.pallas_call(
        kernel,
        out_shape=(
            jax.ShapeDtypeStruct((B, O_pad), jnp.float32),
            jax.ShapeDtypeStruct((L, B, H), jnp.float32),
            jax.ShapeDtypeStruct((L, B, H), jnp.float32),
        ),
        in_specs=[vmem_spec] * n_inputs,
        out_specs=(vmem_spec, vmem_spec, vmem_spec),
        input_output_aliases={1: 1, 2: 2},   # hidden -> h_out, cell -> c_out
        cost_estimate=pl.CostEstimate(
            flops=flops,
            transcendentals=transcendentals,
            bytes_accessed=bytes_accessed,
        ),
    )(x, hidden, cell, *weight_args, prep["fc_w_t"], prep["fc_b"])

    pred = pred_pad[:, :out_dim] if O_pad != out_dim else pred_pad
    return pred, h_out, c_out


def _reference_forward(tokens, hidden, cell, params):
    """Plain-JAX reference (same math) for sanity checking."""
    x = jnp.take(params["embedding"], tokens, axis=0)
    H = hidden.shape[-1]
    h_new, c_new = [], []
    for l, lp in enumerate(params["layers"]):
        gates = x @ lp["w_ih"].T + hidden[l] @ lp["w_hh"].T + lp["b_ih"] + lp["b_hh"]
        i_g = jax.nn.sigmoid(gates[:, 0 * H:1 * H])
        f_g = jax.nn.sigmoid(gates[:, 1 * H:2 * H])
        g_g = jnp.tanh(gates[:, 2 * H:3 * H])
        o_g = jax.nn.sigmoid(gates[:, 3 * H:4 * H])
        c = f_g * cell[l] + i_g * g_g
        h = o_g * jnp.tanh(c)
        h_new.append(h)
        c_new.append(c)
        x = h
    pred = x @ params["fc_w"].T + params["fc_b"]
    return pred, jnp.stack(h_new), jnp.stack(c_new)


if __name__ == "__main__":
    OUTPUT_DIM = 64   # vocab size
    EMB_DIM = 32
    HIDDEN_DIM = 32
    N_LAYERS = 2
    BATCH = 2

    key = jax.random.PRNGKey(0)
    k_param, k_tok, k_h, k_c = jax.random.split(key, 4)

    params = init_decoder_params(k_param, OUTPUT_DIM, EMB_DIM, HIDDEN_DIM, N_LAYERS)
    prep = prepare_decoder_params(params)   # one-time layout prep (out of step loop)

    tokens = jax.random.randint(k_tok, (BATCH,), 0, OUTPUT_DIM, dtype=jnp.int32)
    hidden = jax.random.normal(k_h, (N_LAYERS, BATCH, HIDDEN_DIM), jnp.float32)
    cell = jax.random.normal(k_c, (N_LAYERS, BATCH, HIDDEN_DIM), jnp.float32)

    pred, h_out, c_out = decoder_forward(tokens, hidden, cell, prep, out_dim=OUTPUT_DIM)
    jax.block_until_ready((pred, h_out, c_out))

    # Sanity check vs. plain-JAX reference.
    pred_r, h_r, c_r = _reference_forward(tokens, hidden, cell, params)
    assert jnp.allclose(pred, pred_r, rtol=1e-5, atol=1e-5)
    assert jnp.allclose(h_out, h_r, rtol=1e-5, atol=1e-5)
    assert jnp.allclose(c_out, c_r, rtol=1e-5, atol=1e-5)

    print("KERNEL_OK")
</pallas_src>

<mosaic_0001>
module attributes {stable_mosaic.version = 11 : i64} {
  func.func @kernel(%arg0: memref<2x32xf32, #tpu.memory_space<vmem>>, %arg1: memref<2x2x32xf32, #tpu.memory_space<vmem>>, %arg2: memref<2x2x32xf32, #tpu.memory_space<vmem>>, %arg3: memref<64x128xf32, #tpu.memory_space<vmem>>, %arg4: memref<1x128xf32, #tpu.memory_space<vmem>>, %arg5: memref<64x128xf32, #tpu.memory_space<vmem>>, %arg6: memref<1x128xf32, #tpu.memory_space<vmem>>, %arg7: memref<32x128xf32, #tpu.memory_space<vmem>>, %arg8: memref<1x128xf32, #tpu.memory_space<vmem>>, %arg9: memref<2x128xf32, #tpu.memory_space<vmem>>, %arg10: memref<2x2x32xf32, #tpu.memory_space<vmem>>, %arg11: memref<2x2x32xf32, #tpu.memory_space<vmem>>) attributes {dimension_semantics = [], scalar_prefetch = 0 : i64, scratch_operands = 0 : i64, tpu.core_type = #tpu.core_type<tc>} {
    %c0 = arith.constant 0 : index
    %c0_0 = arith.constant 0 : index
    %0 = vector.load %arg0[%c0, %c0_0] : memref<2x32xf32, #tpu.memory_space<vmem>>, vector<2x32xf32>
    %c0_1 = arith.constant 0 : index
    %c0_2 = arith.constant 0 : index
    %1 = vector.load %arg3[%c0_1, %c0_2] : memref<64x128xf32, #tpu.memory_space<vmem>>, vector<64x128xf32>
    %c0_3 = arith.constant 0 : index
    %c0_4 = arith.constant 0 : index
    %2 = vector.load %arg4[%c0_3, %c0_4] : memref<1x128xf32, #tpu.memory_space<vmem>>, vector<1x128xf32>
    %c0_5 = arith.constant 0 : index
    %c0_6 = arith.constant 0 : index
    %c0_7 = arith.constant 0 : index
    %3 = vector.load %arg1[%c0_5, %c0_6, %c0_7] : memref<2x2x32xf32, #tpu.memory_space<vmem>>, vector<1x2x32xf32>
    %4 = vector.shape_cast %3 : vector<1x2x32xf32> to vector<2x32xf32>
    %c0_8 = arith.constant 0 : index
    %c0_9 = arith.constant 0 : index
    %c0_10 = arith.constant 0 : index
    %5 = vector.load %arg2[%c0_8, %c0_9, %c0_10] : memref<2x2x32xf32, #tpu.memory_space<vmem>>, vector<1x2x32xf32>
    %6 = vector.shape_cast %5 : vector<1x2x32xf32> to vector<2x32xf32>
    %7 = tpu.concatenate %0, %4 in 1 : vector<2x32xf32>, vector<2x32xf32> -> vector<2x64xf32>
    %cst = arith.constant dense<0.000000e+00> : vector<2x128xf32>
    %8 = tpu.matmul %7, %1, %cst {dimension_numbers = #tpu.dot_dimension_numbers<[1], [0], [0], [1], [0, 0, 1, 1], [], []>} : vector<2x64xf32>, vector<64x128xf32>, vector<2x128xf32> -> vector<2x128xf32>
    %9 = vector.broadcast %2 : vector<1x128xf32> to vector<2x128xf32>
    %10 = arith.addf %8, %9 : vector<2x128xf32>
    %11 = arith.negf %10 : vector<2x128xf32>
    %12 = math.exp %11 : vector<2x128xf32>
    %cst_11 = arith.constant 1.000000e+00 : f32
    %13 = vector.broadcast %cst_11 : f32 to vector<2x128xf32>
    %14 = arith.addf %13, %12 : vector<2x128xf32>
    %15 = arith.divf %13, %14 : vector<2x128xf32>
    %16 = vector.extract_strided_slice %15 {offsets = [0, 0], sizes = [2, 32], strides = [1, 1]} : vector<2x128xf32> to vector<2x32xf32>
    %17 = vector.extract_strided_slice %15 {offsets = [0, 32], sizes = [2, 32], strides = [1, 1]} : vector<2x128xf32> to vector<2x32xf32>
    %18 = vector.extract_strided_slice %15 {offsets = [0, 96], sizes = [2, 32], strides = [1, 1]} : vector<2x128xf32> to vector<2x32xf32>
    %19 = vector.extract_strided_slice %10 {offsets = [0, 64], sizes = [2, 32], strides = [1, 1]} : vector<2x128xf32> to vector<2x32xf32>
    %20 = math.tanh %19 : vector<2x32xf32>
    %21 = arith.mulf %17, %6 : vector<2x32xf32>
    %22 = arith.mulf %16, %20 : vector<2x32xf32>
    %23 = arith.addf %21, %22 : vector<2x32xf32>
    %24 = math.tanh %23 : vector<2x32xf32>
    %25 = arith.mulf %18, %24 : vector<2x32xf32>
    %c0_12 = arith.constant 0 : index
    %c0_13 = arith.constant 0 : index
    %c0_14 = arith.constant 0 : index
    %26 = vector.load %arg10[%c0_12, %c0_13, %c0_14] : memref<2x2x32xf32, #tpu.memory_space<vmem>>, vector<1x2x32xf32>
    %27 = vector.shape_cast %26 : vector<1x2x32xf32> to vector<2x32xf32>
    %28 = vector.shape_cast %25 : vector<2x32xf32> to vector<1x2x32xf32>
    tpu.vector_store %arg10[%c0_12, %c0_13, %c0_14], %28 {strides = array<i32>} : memref<2x2x32xf32, #tpu.memory_space<vmem>>, vector<1x2x32xf32>,
    %c0_15 = arith.constant 0 : index
    %c0_16 = arith.constant 0 : index
    %c0_17 = arith.constant 0 : index
    %29 = vector.load %arg11[%c0_15, %c0_16, %c0_17] : memref<2x2x32xf32, #tpu.memory_space<vmem>>, vector<1x2x32xf32>
    %30 = vector.shape_cast %29 : vector<1x2x32xf32> to vector<2x32xf32>
    %31 = vector.shape_cast %23 : vector<2x32xf32> to vector<1x2x32xf32>
    tpu.vector_store %arg11[%c0_15, %c0_16, %c0_17], %31 {strides = array<i32>} : memref<2x2x32xf32, #tpu.memory_space<vmem>>, vector<1x2x32xf32>,
    %c0_18 = arith.constant 0 : index
    %c0_19 = arith.constant 0 : index
    %32 = vector.load %arg5[%c0_18, %c0_19] : memref<64x128xf32, #tpu.memory_space<vmem>>, vector<64x128xf32>
    %c0_20 = arith.constant 0 : index
    %c0_21 = arith.constant 0 : index
    %33 = vector.load %arg6[%c0_20, %c0_21] : memref<1x128xf32, #tpu.memory_space<vmem>>, vector<1x128xf32>
    %c1 = arith.constant 1 : index
    %c0_22 = arith.constant 0 : index
    %c0_23 = arith.constant 0 : index
    %34 = vector.load %arg1[%c1, %c0_22, %c0_23] : memref<2x2x32xf32, #tpu.memory_space<vmem>>, vector<1x2x32xf32>
    %35 = vector.shape_cast %34 : vector<1x2x32xf32> to vector<2x32xf32>
    %c1_24 = arith.constant 1 : index
    %c0_25 = arith.constant 0 : index
    %c0_26 = arith.constant 0 : index
    %36 = vector.load %arg2[%c1_24, %c0_25, %c0_26] : memref<2x2x32xf32, #tpu.memory_space<vmem>>, vector<1x2x32xf32>
    %37 = vector.shape_cast %36 : vector<1x2x32xf32> to vector<2x32xf32>
    %38 = tpu.concatenate %25, %35 in 1 : vector<2x32xf32>, vector<2x32xf32> -> vector<2x64xf32>
    %cst_27 = arith.constant dense<0.000000e+00> : vector<2x128xf32>
    %39 = tpu.matmul %38, %32, %cst_27 {dimension_numbers = #tpu.dot_dimension_numbers<[1], [0], [0], [1], [0, 0, 1, 1], [], []>} : vector<2x64xf32>, vector<64x128xf32>, vector<2x128xf32> -> vector<2x128xf32>
    %40 = vector.broadcast %33 : vector<1x128xf32> to vector<2x128xf32>
    %41 = arith.addf %39, %40 : vector<2x128xf32>
    %42 = arith.negf %41 : vector<2x128xf32>
    %43 = math.exp %42 : vector<2x128xf32>
    %cst_28 = arith.constant 1.000000e+00 : f32
    %44 = vector.broadcast %cst_28 : f32 to vector<2x128xf32>
    %45 = arith.addf %44, %43 : vector<2x128xf32>
    %46 = arith.divf %44, %45 : vector<2x128xf32>
    %47 = vector.extract_strided_slice %46 {offsets = [0, 0], sizes = [2, 32], strides = [1, 1]} : vector<2x128xf32> to vector<2x32xf32>
    %48 = vector.extract_strided_slice %46 {offsets = [0, 32], sizes = [2, 32], strides = [1, 1]} : vector<2x128xf32> to vector<2x32xf32>
    %49 = vector.extract_strided_slice %46 {offsets = [0, 96], sizes = [2, 32], strides = [1, 1]} : vector<2x128xf32> to vector<2x32xf32>
    %50 = vector.extract_strided_slice %41 {offsets = [0, 64], sizes = [2, 32], strides = [1, 1]} : vector<2x128xf32> to vector<2x32xf32>
    %51 = math.tanh %50 : vector<2x32xf32>
    %52 = arith.mulf %48, %37 : vector<2x32xf32>
    %53 = arith.mulf %47, %51 : vector<2x32xf32>
    %54 = arith.addf %52, %53 : vector<2x32xf32>
    %55 = math.tanh %54 : vector<2x32xf32>
    %56 = arith.mulf %49, %55 : vector<2x32xf32>
    %c1_29 = arith.constant 1 : index
    %c0_30 = arith.constant 0 : index
    %c0_31 = arith.constant 0 : index
    %57 = vector.load %arg10[%c1_29, %c0_30, %c0_31] : memref<2x2x32xf32, #tpu.memory_space<vmem>>, vector<1x2x32xf32>
    %58 = vector.shape_cast %57 : vector<1x2x32xf32> to vector<2x32xf32>
    %59 = vector.shape_cast %56 : vector<2x32xf32> to vector<1x2x32xf32>
    tpu.vector_store %arg10[%c1_29, %c0_30, %c0_31], %59 {strides = array<i32>} : memref<2x2x32xf32, #tpu.memory_space<vmem>>, vector<1x2x32xf32>,
    %c1_32 = arith.constant 1 : index
    %c0_33 = arith.constant 0 : index
    %c0_34 = arith.constant 0 : index
    %60 = vector.load %arg11[%c1_32, %c0_33, %c0_34] : memref<2x2x32xf32, #tpu.memory_space<vmem>>, vector<1x2x32xf32>
    %61 = vector.shape_cast %60 : vector<1x2x32xf32> to vector<2x32xf32>
    %62 = vector.shape_cast %54 : vector<2x32xf32> to vector<1x2x32xf32>
    tpu.vector_store %arg11[%c1_32, %c0_33, %c0_34], %62 {strides = array<i32>} : memref<2x2x32xf32, #tpu.memory_space<vmem>>, vector<1x2x32xf32>,
    %c0_35 = arith.constant 0 : index
    %c0_36 = arith.constant 0 : index
    %63 = vector.load %arg7[%c0_35, %c0_36] : memref<32x128xf32, #tpu.memory_space<vmem>>, vector<32x128xf32>
    %cst_37 = arith.constant dense<0.000000e+00> : vector<2x128xf32>
    %64 = tpu.matmul %56, %63, %cst_37 {dimension_numbers = #tpu.dot_dimension_numbers<[1], [0], [0], [1], [0, 0, 1, 1], [], []>} : vector<2x32xf32>, vector<32x128xf32>, vector<2x128xf32> -> vector<2x128xf32>
    %c0_38 = arith.constant 0 : index
    %c0_39 = arith.constant 0 : index
    %65 = vector.load %arg8[%c0_38, %c0_39] : memref<1x128xf32, #tpu.memory_space<vmem>>, vector<1x128xf32>
    %66 = vector.broadcast %65 : vector<1x128xf32> to vector<2x128xf32>
    %67 = arith.addf %64, %66 : vector<2x128xf32>
    %c0_40 = arith.constant 0 : index
    %c0_41 = arith.constant 0 : index
    %68 = vector.load %arg9[%c0_40, %c0_41] : memref<2x128xf32, #tpu.memory_space<vmem>>, vector<2x128xf32>
    tpu.vector_store %arg9[%c0_40, %c0_41], %67 {strides = array<i32>} : memref<2x128xf32, #tpu.memory_space<vmem>>, vector<2x128xf32>,
    return
  }
}

</mosaic_0001>

<llo_original>
// kernel: decoder_forward.1
$region0: #{decoder_forward.1}
  #allocation0 [shape = 'u32[]', space=smem, size = 0x4, offset = 0x4, fixed_abs, tag = 'smem constant byte address 0x4 - core index']
  #allocation1 [shape = 'u32[144,128]{1,0:T(1,128)}', space=vmem, size = 0x12000, scoped, tag = 'internal scratch']
  %s0 = inlined_call_operand.vmem [shape: f32[2,32], index: 0, kind: input, shape index: {}]
  %s1 = inlined_call_operand.vmem [shape: f32[2,2,32], index: 1, kind: input, shape index: {}, may-alias: {1,10}]
  %s2 = inlined_call_operand.vmem [shape: f32[2,2,32], index: 2, kind: input, shape index: {}, may-alias: {2,11}]
  %s3 = inlined_call_operand.vmem [shape: f32[64,128], index: 3, kind: input, shape index: {}]
  %s4 = inlined_call_operand.vmem [shape: f32[1,128], index: 4, kind: input, shape index: {}]
  %s5 = inlined_call_operand.vmem [shape: f32[64,128], index: 5, kind: input, shape index: {}]
  %s6 = inlined_call_operand.vmem [shape: f32[1,128], index: 6, kind: input, shape index: {}]
  %s7 = inlined_call_operand.vmem [shape: f32[32,128], index: 7, kind: input, shape index: {}]
  %s8 = inlined_call_operand.vmem [shape: f32[1,128], index: 8, kind: input, shape index: {}]
  %s9 = inlined_call_operand.hbm [shape: f32[2,128], index: 9, kind: output, shape index: {0}]
  %s10 = inlined_call_operand.vmem [shape: f32[2,2,32], index: 10, kind: output, shape index: {1}, may-alias: {1,10}]
  %s11 = inlined_call_operand.vmem [shape: f32[2,2,32], index: 11, kind: output, shape index: {2}, may-alias: {2,11}]
  %12 = xla_tuple %s9, %s10, %s11
  %s13 = sld [smem:[#allocation0]]
  $region62: #{decoder_forward.1} parent=0
    _
  %s15 = ssub.s32 1, %s13
  %s16 = scalar_select 0, %s15, %s13
  $region1: #{decoder_forward.1} parent=0
    #allocation2 [shape = 'u8[1024]{0}', space=vmem, size = 0x400, scoped, tag = 'output window, operand 0, single buffered']
    #allocation3 [shape = 's32[1]{0}', space=sflag, size = 0x4, scoped, tag = 'scoped memory for decoder_forward.1']
    %17 = vsyncpa [#allocation3], 0
    // Predicated region
    $region2: #{decoder_forward.1} parent=1 // pred_check
      _
    $region3: #{decoder_forward.1} parent=1 // pred_check_branch
      %19 = sbr.rel (0) target = $region5
    $region4: #{decoder_forward.1} parent=1 // pred_region
      _
    $region5: #{decoder_forward.1} parent=1 // pred_fallthru
      _
    // Predicated region
    $region6: #{decoder_forward.1} parent=1 // pred_check
      _
    $region7: #{decoder_forward.1} parent=1 // pred_check_branch
      %21 = sbr.rel (0) target = $region9
    $region8: #{decoder_forward.1} parent=1 // pred_region
      _
    $region9: #{decoder_forward.1} parent=1 // pred_fallthru
      _
    // Predicated region
    $region10: #{decoder_forward.1} parent=1 // pred_check
      _
    $region11: #{decoder_forward.1} parent=1 // pred_check_branch
      %23 = sbr.rel (0) target = $region13
    $region12: #{decoder_forward.1} parent=1 // pred_region
      _
    $region13: #{decoder_forward.1} parent=1 // pred_fallthru
      _
    // Predicated region
    $region14: #{decoder_forward.1} parent=1 // pred_check
      _
    $region15: #{decoder_forward.1} parent=1 // pred_check_branch
      %25 = sbr.rel (0) target = $region17
    $region16: #{decoder_forward.1} parent=1 // pred_region
      _
    $region17: #{decoder_forward.1} parent=1 // pred_fallthru
      _
    // Predicated region
    $region18: #{decoder_forward.1} parent=1 // pred_check
      _
    $region19: #{decoder_forward.1} parent=1 // pred_check_branch
      %27 = sbr.rel (0) target = $region21
    $region20: #{decoder_forward.1} parent=1 // pred_region
      _
    $region21: #{decoder_forward.1} parent=1 // pred_fallthru
      _
    // Predicated region
    $region22: #{decoder_forward.1} parent=1 // pred_check
      _
    $region23: #{decoder_forward.1} parent=1 // pred_check_branch
      %29 = sbr.rel (0) target = $region25
    $region24: #{decoder_forward.1} parent=1 // pred_region
      _
    $region25: #{decoder_forward.1} parent=1 // pred_fallthru
      _
    // Predicated region
    $region26: #{decoder_forward.1} parent=1 // pred_check
      _
    $region27: #{decoder_forward.1} parent=1 // pred_check_branch
      %31 = sbr.rel (0) target = $region29
    $region28: #{decoder_forward.1} parent=1 // pred_region
      _
    $region29: #{decoder_forward.1} parent=1 // pred_fallthru
      _
    // Predicated region
    $region30: #{decoder_forward.1} parent=1 // pred_check
      _
    $region31: #{decoder_forward.1} parent=1 // pred_check_branch
      %33 = sbr.rel (0) target = $region33
    $region32: #{decoder_forward.1} parent=1 // pred_region
      _
    $region33: #{decoder_forward.1} parent=1 // pred_fallthru
      _
    // Predicated region
    $region34: #{decoder_forward.1} parent=1 // pred_check
      _
    $region35: #{decoder_forward.1} parent=1 // pred_check_branch
      %35 = sbr.rel (0) target = $region37
    $region36: #{decoder_forward.1} parent=1 // pred_region
      _
    $region37: #{decoder_forward.1} parent=1 // pred_fallthru
      _
    %v36 = vld [vmem:[%s0] sm:$0x3]
    %v37 = vld [vmem:[%s3] sm:$0xff]
    %v38 = vld [vmem:[%s3 + $0x8] sm:$0xff]
    %v39 = vld [vmem:[%s3 + $0x10] sm:$0xff]
    %v40 = vld [vmem:[%s3 + $0x18] sm:$0xff]
    %v41 = vld [vmem:[%s3 + $0x20] sm:$0xff]
    %v42 = vld [vmem:[%s3 + $0x28] sm:$0xff]
    %v43 = vld [vmem:[%s3 + $0x30] sm:$0xff]
    %v44 = vld [vmem:[%s3 + $0x38] sm:$0xff]
    %v45 = vld [vmem:[%s4] sm:$0x1]
    %v46 = vld [vmem:[%s1] sm:$0x3]
    %v47 = vld [vmem:[%s2] sm:$0x3]
    %49 = vrot.lane.b32.xlu0 %v46, 32
    %v50 = vpop.permute.xlu0 %49
    %vm52 = vcmask 261120
    %v53 = vsel %vm52, %v36, %v50
    %v55 = vlaneseq
    %v56 = vshrl.u32 %v55, 7
    %v57 = vsub.s32 0, %v56
    %v58 = vrot.slane %v45, %v57
    %vm60 = vcmask 523264
    %v62 = vsel %vm60, %v53, 0
    %64 = vmatprep.subr.mxu0 0.0
    %65 = vmatpush1.msra.mxu0 %v37
    %66 = vmatprep.subr.mxu0 0.0
    %67 = vmatpush1.msra.mxu0 %v38
    %68 = vmatprep.subr.mxu0 0.0
    %69 = vmatpush1.msra.mxu0 %v39
    %70 = vmatprep.subr.mxu0 0.0
    %71 = vmatpush1.msra.mxu0 %v40
    %72 = vmatprep.subr.mxu0 0.0
    %73 = vmatpush1.msra.mxu0 %v41
    %74 = vmatprep.subr.mxu0 0.0
    %75 = vmatpush1.msra.mxu0 %v42
    %76 = vmatprep.subr.mxu0 0.0
    %77 = vmatpush1.msra.mxu0 %v43
    %78 = vmatprep.subr.mxu0 0.0
    %79 = vmatpush1.msra.mxu0 %v44
    %80 = vmatprep.subr.mxu0 0.0
    %81 = vmatpush1.msra.mxu0 0.0
    %82 = vmatprep.subr.mxu0 0.0
    %83 = vmatpush1.msra.mxu0 0.0
    %84 = vmatprep.subr.mxu0 0.0
    %85 = vmatpush1.msra.mxu0 0.0
    %86 = vmatprep.subr.mxu0 0.0
    %87 = vmatpush1.msra.mxu0 0.0
    %88 = vmatprep.subr.mxu0 0.0
    %89 = vmatpush1.msra.mxu0 0.0
    %90 = vmatprep.subr.mxu0 0.0
    %91 = vmatpush1.msra.mxu0 0.0
    %92 = vmatprep.subr.mxu0 0.0
    %93 = vmatpush1.msra.mxu0 0.0
    %94 = vmatprep.subr.mxu0 0.0
    %95 = vmatpush1.msra.mxu0 0.0
    %96 = vmatprep.subr.mxu0 0.0
    %97 = vmatpush1.msra.mxu0 0.0
    %98 = vmatprep.subr.mxu0 0.0
    %99 = vmatpush1.msra.mxu0 0.0
    %100 = vmatprep.subr.mxu0 0.0
    %101 = vmatpush1.msra.mxu0 0.0
    %102 = vmatprep.subr.mxu0 0.0
    %103 = vmatpush1.msra.mxu0 0.0
    %104 = vmatprep.subr.mxu0 0.0
    %105 = vmatpush1.msra.mxu0 0.0
    %106 = vmatprep.subr.mxu0 0.0
    %107 = vmatpush1.msra.mxu0 0.0
    %108 = vmatprep.subr.mxu0 0.0
    %109 = vmatpush1.msra.mxu0 0.0
    %110 = vmatprep.subr.mxu0 0.0
    %111 = vmatpush1.msra.mxu0 0.0
    %112 = vmatprep.subr.mxu0 0.0
    %113 = vmatpush1.msra.mxu0 0.0
    %114 = vmatprep.subr.mxu0 0.0
    %115 = vmatpush1.msra.mxu0 0.0
    %116 = vmatprep.subr.mxu0 0.0
    %117 = vmatpush1.msra.mxu0 0.0
    %118 = vmatprep.subr.mxu0 0.0
    %119 = vmatpush1.msra.mxu0 0.0
    %120 = vmatprep.subr.mxu0 0.0
    %121 = vmatpush1.msra.mxu0 0.0
    %122 = vmatprep.subr.mxu0 0.0
    %123 = vmatpush1.msra.mxu0 0.0
    %124 = vmatprep.subr.mxu0 0.0
    %125 = vmatpush1.msra.mxu0 0.0
    %126 = vmatprep.subr.mxu0 0.0
    %127 = vmatpush1.msra.mxu0 0.0
    %128 = vmatprep.mubr.f32.mxu0 0.0
    %129 = vmatmul.mubr.f32.gmra.mrb[0].mxu0 %v62
    %v130 = vpop.f32.mrb[0].mxu0
    %v131 = vadd.f32 %v58, %v130
    %v132 = vpop.f32.mrb[0].mxu0
    %133 = vdwg.mxu0
    %v134 = vxor.u32 %v131, 2147483648
    %v135 = vmul.f32 %v134, 1.442695
    %v136 = vpow.pop %v135
    %v137 = vadd.f32 %v136, 1.0
    %v138 = vrcp.pop %v137
    %v139 = vmul.f32 1.0, %v138
    %v140 = vtanh.pop %v131
    %142 = vrot.lane.b32.xlu0 %v47, 32
    %v143 = vpop.permute.xlu0 %142
    %v145 = vmul.f32 %v139, %v143
    %147 = vrot.lane.b32.xlu0 %v140, 64
    %v148 = vpop.permute.xlu0 %147
    %v150 = vmul.f32 %v139, %v148
    %152 = vrot.lane.b32.xlu0 %v150, 32
    %v153 = vpop.permute.xlu0 %152
    %v155 = vadd.f32 %v145, %v153
    %v156 = vtanh.pop %v155
    %158 = vrot.lane.b32.xlu0 %v156, 64
    %v159 = vpop.permute.xlu0 %158
    %v161 = vmul.f32 %v139, %v159
    %163 = vrot.lane.b32.xlu0 %v161, 32
    %v164 = vpop.permute.xlu0 %163
    %vm166 = vcmask 254976
    %167 = vst.msk [vmem:[%s10] sm:$0x3] %vm166, %v164
    %169 = vrot.lane.b32.xlu0 %v155, 96
    %v170 = vpop.permute.xlu0 %169
    %172 = vst.msk [vmem:[%s11] sm:$0x3] %vm166, %v170
    %v173 = vld [vmem:[%s5] sm:$0xff]
    %v174 = vld [vmem:[%s5 + $0x8] sm:$0xff]
    %v175 = vld [vmem:[%s5 + $0x10] sm:$0xff]
    %v176 = vld [vmem:[%s5 + $0x18] sm:$0xff]
    %v177 = vld [vmem:[%s5 + $0x20] sm:$0xff]
    %v178 = vld [vmem:[%s5 + $0x28] sm:$0xff]
    %v179 = vld [vmem:[%s5 + $0x30] sm:$0xff]
    %v180 = vld [vmem:[%s5 + $0x38] sm:$0xff]
    %v181 = vld [vmem:[%s6] sm:$0x1]
    %s182 = scalar_lea.vmem %s1, 2
    %v183 = vld [vmem:[%s182] sm:$0x3]
    %s184 = scalar_lea.vmem %s2, 2
    %v185 = vld [vmem:[%s184] sm:$0x3]
    %187 = vrot.lane.b32.xlu0 %v183, 32
    %v188 = vpop.permute.xlu0 %187
    %v190 = vsel %vm52, %v164, %v188
    %v192 = vlaneseq
    %v193 = vshrl.u32 %v192, 7
    %v194 = vsub.s32 0, %v193
    %v195 = vrot.slane %v181, %v194
    %v198 = vsel %vm60, %v190, 0
    %200 = vmatprep.subr.mxu0 0.0
    %201 = vmatpush1.msra.mxu0 %v173
    %202 = vmatprep.subr.mxu0 0.0
    %203 = vmatpush1.msra.mxu0 %v174
    %204 = vmatprep.subr.mxu0 0.0
    %205 = vmatpush1.msra.mxu0 %v175
    %206 = vmatprep.subr.mxu0 0.0
    %207 = vmatpush1.msra.mxu0 %v176
    %208 = vmatprep.subr.mxu0 0.0
    %209 = vmatpush1.msra.mxu0 %v177
    %210 = vmatprep.subr.mxu0 0.0
    %211 = vmatpush1.msra.mxu0 %v178
    %212 = vmatprep.subr.mxu0 0.0
    %213 = vmatpush1.msra.mxu0 %v179
    %214 = vmatprep.subr.mxu0 0.0
    %215 = vmatpush1.msra.mxu0 %v180
    %216 = vmatprep.subr.mxu0 0.0
    %217 = vmatpush1.msra.mxu0 0.0
    %218 = vmatprep.subr.mxu0 0.0
    %219 = vmatpush1.msra.mxu0 0.0
    %220 = vmatprep.subr.mxu0 0.0
    %221 = vmatpush1.msra.mxu0 0.0
    %222 = vmatprep.subr.mxu0 0.0
    %223 = vmatpush1.msra.mxu0 0.0
    %224 = vmatprep.subr.mxu0 0.0
    %225 = vmatpush1.msra.mxu0 0.0
    %226 = vmatprep.subr.mxu0 0.0
    %227 = vmatpush1.msra.mxu0 0.0
    %228 = vmatprep.subr.mxu0 0.0
    %229 = vmatpush1.msra.mxu0 0.0
    %230 = vmatprep.subr.mxu0 0.0
    %231 = vmatpush1.msra.mxu0 0.0
    %232 = vmatprep.subr.mxu0 0.0
    %233 = vmatpush1.msra.mxu0 0.0
    %234 = vmatprep.subr.mxu0 0.0
    %235 = vmatpush1.msra.mxu0 0.0
    %236 = vmatprep.subr.mxu0 0.0
    %237 = vmatpush1.msra.mxu0 0.0
    %238 = vmatprep.subr.mxu0 0.0
    %239 = vmatpush1.msra.mxu0 0.0
    %240 = vmatprep.subr.mxu0 0.0
    %241 = vmatpush1.msra.mxu0 0.0
    %242 = vmatprep.subr.mxu0 0.0
    %243 = vmatpush1.msra.mxu0 0.0
    %244 = vmatprep.subr.mxu0 0.0
    %245 = vmatpush1.msra.mxu0 0.0
    %246 = vmatprep.subr.mxu0 0.0
    %247 = vmatpush1.msra.mxu0 0.0
    %248 = vmatprep.subr.mxu0 0.0
    %249 = vmatpush1.msra.mxu0 0.0
    %250 = vmatprep.subr.mxu0 0.0
    %251 = vmatpush1.msra.mxu0 0.0
    %252 = vmatprep.subr.mxu0 0.0
    %253 = vmatpush1.msra.mxu0 0.0
    %254 = vmatprep.subr.mxu0 0.0
    %255 = vmatpush1.msra.mxu0 0.0
    %256 = vmatprep.subr.mxu0 0.0
    %257 = vmatpush1.msra.mxu0 0.0
    %258 = vmatprep.subr.mxu0 0.0
    %259 = vmatpush1.msra.mxu0 0.0
    %260 = vmatprep.subr.mxu0 0.0
    %261 = vmatpush1.msra.mxu0 0.0
    %262 = vmatprep.subr.mxu0 0.0
    %263 = vmatpush1.msra.mxu0 0.0
    %264 = vmatprep.mubr.f32.mxu0 0.0
    %265 = vmatmul.mubr.f32.gmra.mrb[0].mxu0 %v198
    %v266 = vpop.f32.mrb[0].mxu0
    %v267 = vadd.f32 %v195, %v266
    %v268 = vpop.f32.mrb[0].mxu0
    %269 = vdwg.mxu0
    %v270 = vxor.u32 %v267, 2147483648
    %v271 = vmul.f32 %v270, 1.442695
    %v272 = vpow.pop %v271
    %v273 = vadd.f32 %v272, 1.0
    %v274 = vrcp.pop %v273
    %v275 = vmul.f32 1.0, %v274
    %v276 = vtanh.pop %v267
    %278 = vrot.lane.b32.xlu0 %v185, 32
    %v279 = vpop.permute.xlu0 %278
    %v281 = vmul.f32 %v275, %v279
    %283 = vrot.lane.b32.xlu0 %v276, 64
    %v284 = vpop.permute.xlu0 %283
    %v286 = vmul.f32 %v275, %v284
    %288 = vrot.lane.b32.xlu0 %v286, 32
    %v289 = vpop.permute.xlu0 %288
    %v291 = vadd.f32 %v281, %v289
    %v292 = vtanh.pop %v291
    %294 = vrot.lane.b32.xlu0 %v292, 64
    %v295 = vpop.permute.xlu0 %294
    %v297 = vmul.f32 %v275, %v295
    %299 = vrot.lane.b32.xlu0 %v297, 32
    %v300 = vpop.permute.xlu0 %299
    %s302 = scalar_lea.vmem %s10, 2
    %303 = vst.msk [vmem:[%s302] sm:$0x3] %vm166, %v300
    %305 = vrot.lane.b32.xlu0 %v291, 96
    %v306 = vpop.permute.xlu0 %305
    %s308 = scalar_lea.vmem %s11, 2
    %309 = vst.msk [vmem:[%s308] sm:$0x3] %vm166, %v306
    %v310 = vld [vmem:[%s7] sm:$0xff]
    %v311 = vld [vmem:[%s7 + $0x8] sm:$0xff]
    %v312 = vld [vmem:[%s7 + $0x10] sm:$0xff]
    %v313 = vld [vmem:[%s7 + $0x18] sm:$0xff]
    %v314 = vld [vmem:[%s8] sm:$0x1]
    %v316 = vlaneseq
    %v317 = vshrl.u32 %v316, 7
    %v318 = vsub.s32 0, %v317
    %v319 = vrot.slane %v314, %v318
    %v321 = vsel %vm52, %v300, 0
    %323 = vmatprep.subr.mxu0 0.0
    %324 = vmatpush1.msra.mxu0 %v310
    %325 = vmatprep.subr.mxu0 0.0
    %326 = vmatpush1.msra.mxu0 %v311
    %327 = vmatprep.subr.mxu0 0.0
    %328 = vmatpush1.msra.mxu0 %v312
    %329 = vmatprep.subr.mxu0 0.0
    %330 = vmatpush1.msra.mxu0 %v313
    %331 = vmatprep.subr.mxu0 0.0
    %332 = vmatpush1.msra.mxu0 0.0
    %333 = vmatprep.subr.mxu0 0.0
    %334 = vmatpush1.msra.mxu0 0.0
    %335 = vmatprep.subr.mxu0 0.0
    %336 = vmatpush1.msra.mxu0 0.0
    %337 = vmatprep.subr.mxu0 0.0
    %338 = vmatpush1.msra.mxu0 0.0
    %339 = vmatprep.subr.mxu0 0.0
    %340 = vmatpush1.msra.mxu0 0.0
    %341 = vmatprep.subr.mxu0 0.0
    %342 = vmatpush1.msra.mxu0 0.0
    %343 = vmatprep.subr.mxu0 0.0
    %344 = vmatpush1.msra.mxu0 0.0
    %345 = vmatprep.subr.mxu0 0.0
    %346 = vmatpush1.msra.mxu0 0.0
    %347 = vmatprep.subr.mxu0 0.0
    %348 = vmatpush1.msra.mxu0 0.0
    %349 = vmatprep.subr.mxu0 0.0
    %350 = vmatpush1.msra.mxu0 0.0
    %351 = vmatprep.subr.mxu0 0.0
    %352 = vmatpush1.msra.mxu0 0.0
    %353 = vmatprep.subr.mxu0 0.0
    %354 = vmatpush1.msra.mxu0 0.0
    %355 = vmatprep.subr.mxu0 0.0
    %356 = vmatpush1.msra.mxu0 0.0
    %357 = vmatprep.subr.mxu0 0.0
    %358 = vmatpush1.msra.mxu0 0.0
    %359 = vmatprep.subr.mxu0 0.0
    %360 = vmatpush1.msra.mxu0 0.0
    %361 = vmatprep.subr.mxu0 0.0
    %362 = vmatpush1.msra.mxu0 0.0
    %363 = vmatprep.subr.mxu0 0.0
    %364 = vmatpush1.msra.mxu0 0.0
    %365 = vmatprep.subr.mxu0 0.0
    %366 = vmatpush1.msra.mxu0 0.0
    %367 = vmatprep.subr.mxu0 0.0
    %368 = vmatpush1.msra.mxu0 0.0
    %369 = vmatprep.subr.mxu0 0.0
    %370 = vmatpush1.msra.mxu0 0.0
    %371 = vmatprep.subr.mxu0 0.0
    %372 = vmatpush1.msra.mxu0 0.0
    %373 = vmatprep.subr.mxu0 0.0
    %374 = vmatpush1.msra.mxu0 0.0
    %375 = vmatprep.subr.mxu0 0.0
    %376 = vmatpush1.msra.mxu0 0.0
    %377 = vmatprep.subr.mxu0 0.0
    %378 = vmatpush1.msra.mxu0 0.0
    %379 = vmatprep.subr.mxu0 0.0
    %380 = vmatpush1.msra.mxu0 0.0
    %381 = vmatprep.subr.mxu0 0.0
    %382 = vmatpush1.msra.mxu0 0.0
    %383 = vmatprep.subr.mxu0 0.0
    %384 = vmatpush1.msra.mxu0 0.0
    %385 = vmatprep.subr.mxu0 0.0
    %386 = vmatpush1.msra.mxu0 0.0
    %387 = vmatprep.mubr.f32.mxu0 0.0
    %388 = vmatmul.mubr.f32.gmra.mrb[0].mxu0 %v321
    %v389 = vpop.f32.mrb[0].mxu0
    %v390 = vadd.f32 %v319, %v389
    %v391 = vpop.f32.mrb[0].mxu0
    %392 = vdwg.mxu0
    %393 = vst [vmem:[#allocation2] sm:$0x3] %v390
    // Predicated region
    $region38: #{decoder_forward.1} parent=1 // pred_check
      _
    $region39: #{decoder_forward.1} parent=1 // pred_check_branch
      %395 = sbr.rel (0) target = $region41
    $region40: #{decoder_forward.1} parent=1 // pred_region
      %s397 = ssub.s32 32, 32
      %398 = vsyncadd [#allocation3], %s397
      %s400 = sshll.u32 [#allocation2], 4
      %s401 = int_to_ptr.vmem [resolvable:$true] %s400
      %403 = dma.vmem_to_hbm [thread:$0]  %s401, 32, %s9, [#allocation3]
    $region41: #{decoder_forward.1} parent=1 // pred_fallthru
      _
    // Predicated region
    $region42: #{decoder_forward.1} parent=1 // pred_check
      _
    $region43: #{decoder_forward.1} parent=1 // pred_check_branch
      %405 = sbr.rel (0) target = $region45
    $region44: #{decoder_forward.1} parent=1 // pred_region
      _
    $region45: #{decoder_forward.1} parent=1 // pred_fallthru
      _
    // Predicated region
    $region46: #{decoder_forward.1} parent=1 // pred_check
      _
    $region47: #{decoder_forward.1} parent=1 // pred_check_branch
      %407 = sbr.rel (0) target = $region49
    $region48: #{decoder_forward.1} parent=1 // pred_region
      _
    $region49: #{decoder_forward.1} parent=1 // pred_fallthru
      _
    // Predicated region
    $region50: #{decoder_forward.1} parent=1 // pred_check
      _
    $region51: #{decoder_forward.1} parent=1 // pred_check_branch
      %409 = sbr.rel (0) target = $region53
    $region52: #{decoder_forward.1} parent=1 // pred_region
      %410 = dma.done [#allocation3], 32
    $region53: #{decoder_forward.1} parent=1 // pred_fallthru
      _
    // Predicated region
    $region54: #{decoder_forward.1} parent=1 // pred_check
      _
    $region55: #{decoder_forward.1} parent=1 // pred_check_branch
      %412 = sbr.rel (0) target = $region57
    $region56: #{decoder_forward.1} parent=1 // pred_region
      _
    $region57: #{decoder_forward.1} parent=1 // pred_fallthru
      _
    // Predicated region
    $region58: #{decoder_forward.1} parent=1 // pred_check
      _
    $region59: #{decoder_forward.1} parent=1 // pred_check_branch
      %414 = sbr.rel (0) target = $region61
    $region60: #{decoder_forward.1} parent=1 // pred_region
      _
    $region61: #{decoder_forward.1} parent=1 // pred_fallthru
      _
    %415 = vsyncpa [#allocation3], 1

</llo_original>
